<compile_context>
chip_gen: v7x
topology: tpu7x:2x2x1
jax: 0.10.0
libtpu: 0.0.40
codegen_flags: <defaults>
</compile_context>

<pallas_src>
import jax
import jax.numpy as jnp
from jax.experimental import pallas as pl
from jax.experimental.pallas import tpu as pltpu


def make_diffeq(row_tile: int = 4096, pallas_min_elems: int = 1 << 16):
    """Builds the diffeq 'module': deterministic parameters + forward().

    row_tile:          sublane rows per block for the (rows, 128) Pallas path.
    pallas_min_elems:  below this many total elements (2*N) use plain jnp.
    """
    k1, k2 = 2.0, 4.0
    c_diag = -(k1 + k2)   # -6.0
    c_off = k2            # +4.0

    # Unused buffer from __init__ (kept for parity with the module definition).
    _Amatrix_unused = jnp.array([[0.0, 1.0], [-1.0, 0.0]], dtype=jnp.float32)
    del _Amatrix_unused

    def _udot_kernel(y_ref, o_ref):
        # y_ref/o_ref: (rt, 128) f32 tiles of the flat interleaved state
        # [y0_0, y1_0, y0_1, y1_1, ...].  The partner of lane l is lane l^1,
        # always inside the same 128-lane row (128 is even).
        y = y_ref[...]                                          # (rt, 128)
        # Lane-shifted copies (wrap-around entries are masked out below).
        z_left = jnp.concatenate([y[:, 1:], y[:, :1]], axis=1)   # z_left[l]  = y[l+1]
        z_right = jnp.concatenate([y[:, -1:], y[:, :-1]], axis=1)  # z_right[l] = y[l-1]
        lane = jax.lax.broadcasted_iota(jnp.int32, y.shape, 1)
        swapped = jnp.where(lane % 2 == 0, z_left, z_right)      # swapped[l] = y[l^1]
        o_ref[...] = (c_diag * y + c_off * swapped).astype(o_ref.dtype)

    def _udot_small(y):
        # Tiny / ragged batches: two fused VPU FMAs in plain jnp (XLA fuses
        # this into the surrounding solver; no kernel-launch latency).
        y0 = y[:, 0:1]
        y1 = y[:, 1:2]
        return jnp.concatenate(
            [c_diag * y0 + c_off * y1, c_off * y0 + c_diag * y1], axis=1
        )

    def forward(t, y):
        # t is accepted (ODE-solver signature) but unused, matching PyTorch.
        del t
        n = int(y.shape[0])
        total = 2 * n

        if total < pallas_min_elems or total % 128 != 0:
            return _udot_small(y)

        rows = total // 128
        # Free reshape (row-major contiguous): (N, 2) -> (rows, 128).
        yr = y.reshape(rows, 128)

        # Block rows: either the full extent (legal even if not %8) or a big
        # multiple-of-8 tile; Pallas masks the ragged last block.
        rt = rows if rows <= row_tile else row_tile
        grid = (pl.cdiv(rows, rt),)

        out = pl.pallas_call(
            _udot_kernel,
            out_shape=jax.ShapeDtypeStruct((rows, 128), y.dtype),
            grid=grid,
            in_specs=[pl.BlockSpec((rt, 128), lambda i: (i, 0))],
            out_specs=pl.BlockSpec((rt, 128), lambda i: (i, 0)),
            compiler_params=pltpu.CompilerParams(
                dimension_semantics=("parallel",),
            ),
        )(yr)

        # Free reshape back to the caller's (N, 2) layout.
        return out.reshape(n, 2)

    return forward


def udot_ref(y):
    """Pure-JAX reference matching the PyTorch get_udot."""
    k1, k2 = 2.0, 4.0
    Rmat = jnp.array([[k1 + k2, -k2], [-k2, k1 + k2]], dtype=jnp.float32)
    return (-(Rmat @ y.T)).T


if __name__ == "__main__":
    t = jnp.float32(0.0)
    diffeq_fwd = make_diffeq()

    def _check(fwd, n, seed):
        y = jax.random.normal(jax.random.PRNGKey(seed), (n, 2), dtype=jnp.float32)
        out = fwd(t, y)
        jax.block_until_ready(out)
        ref = udot_ref(y)
        assert out.shape == (n, 2), out.shape
        assert jnp.allclose(out, ref, atol=1e-5, rtol=1e-5), (n, out, ref)

    # Small batches -> jnp fast path (matches the module's typical use).
    _check(diffeq_fwd, 8, 0)
    _check(diffeq_fwd, 300, 1)     # non-multiple-of-64 N -> fast path too

    # Larger batch -> Pallas path (rows = 512, single full-extent block).
    _check(diffeq_fwd, 32768, 2)

    # Small-tile instance to exercise multi-block grid + ragged tail masking:
    # N=4160 -> rows=65, row_tile=64 -> grid=(2,), last block has 1 valid row.
    diffeq_fwd_tiled = make_diffeq(row_tile=64, pallas_min_elems=0)
    _check(diffeq_fwd_tiled, 4160, 3)

    print("KERNEL_OK")
</pallas_src>

<mosaic_0001>
module attributes {stable_mosaic.version = 11 : i64} {
  func.func @_udot_kernel(%arg0: i32, %arg1: memref<512x128xf32, #tpu.memory_space<vmem>>, %arg2: memref<512x128xf32, #tpu.memory_space<vmem>>) attributes {dimension_semantics = [#tpu.dimension_semantics<parallel>], iteration_bounds = array<i64: 1>, scalar_prefetch = 0 : i64, scratch_operands = 0 : i64, tpu.core_type = #tpu.core_type<tc>, window_params = [{transform_indices = @transform_0, window_bounds = array<i64: 512, 128>}, {transform_indices = @transform_1, window_bounds = array<i64: 512, 128>}]} {
    %c0 = arith.constant 0 : index
    %c0_0 = arith.constant 0 : index
    %0 = vector.load %arg1[%c0, %c0_0] : memref<512x128xf32, #tpu.memory_space<vmem>>, vector<512x128xf32>
    %1 = vector.extract_strided_slice %0 {offsets = [0, 1], sizes = [512, 127], strides = [1, 1]} : vector<512x128xf32> to vector<512x127xf32>
    %2 = vector.extract_strided_slice %0 {offsets = [0, 0], sizes = [512, 1], strides = [1, 1]} : vector<512x128xf32> to vector<512x1xf32>
    %3 = tpu.concatenate %1, %2 in 1 : vector<512x127xf32>, vector<512x1xf32> -> vector<512x128xf32>
    %4 = vector.extract_strided_slice %0 {offsets = [0, 127], sizes = [512, 1], strides = [1, 1]} : vector<512x128xf32> to vector<512x1xf32>
    %5 = vector.extract_strided_slice %0 {offsets = [0, 0], sizes = [512, 127], strides = [1, 1]} : vector<512x128xf32> to vector<512x127xf32>
    %6 = tpu.concatenate %4, %5 in 1 : vector<512x1xf32>, vector<512x127xf32> -> vector<512x128xf32>
    %7 = tpu.iota {dimensions = array<i32: 1>} : vector<512x128xi32>
    %c2_i32 = arith.constant 2 : i32
    %c0_i32 = arith.constant 0 : i32
    %8 = arith.cmpi eq, %c2_i32, %c0_i32 : i32
    %c1_i32 = arith.constant 1 : i32
    %9 = arith.select %8, %c1_i32, %c2_i32 : i32
    %10 = vector.broadcast %9 : i32 to vector<512x128xi32>
    %11 = arith.remsi %7, %10 : vector<512x128xi32>
    %c0_i32_1 = arith.constant 0 : i32
    %12 = vector.broadcast %c0_i32_1 : i32 to vector<512x128xi32>
    %13 = arith.cmpi ne, %11, %12 : vector<512x128xi32>
    %c0_i32_2 = arith.constant 0 : i32
    %14 = vector.broadcast %c0_i32_2 : i32 to vector<512x128xi32>
    %15 = arith.cmpi slt, %11, %14 : vector<512x128xi32>
    %c0_i32_3 = arith.constant 0 : i32
    %16 = arith.cmpi slt, %9, %c0_i32_3 : i32
    %17 = vector.broadcast %16 : i1 to vector<512x128xi1>
    %18 = vector.broadcast %17 : vector<512x128xi1> to vector<512x128xi1>
    %19 = arith.xori %15, %18 : vector<512x128xi1>
    %20 = arith.andi %19, %13 : vector<512x128xi1>
    %21 = vector.broadcast %9 : i32 to vector<512x128xi32>
    %22 = arith.addi %11, %21 : vector<512x128xi32>
    %23 = arith.select %20, %22, %11 : vector<512x128xi1>, vector<512x128xi32>
    %c0_i32_4 = arith.constant 0 : i32
    %24 = vector.broadcast %c0_i32_4 : i32 to vector<512x128xi32>
    %25 = arith.cmpi eq, %23, %24 : vector<512x128xi32>
    %26 = arith.select %25, %3, %6 : vector<512x128xi1>, vector<512x128xf32>
    %cst = arith.constant -6.000000e+00 : f32
    %27 = vector.broadcast %cst : f32 to vector<512x128xf32>
    %28 = arith.mulf %27, %0 : vector<512x128xf32>
    %cst_5 = arith.constant 4.000000e+00 : f32
    %29 = vector.broadcast %cst_5 : f32 to vector<512x128xf32>
    %30 = arith.mulf %29, %26 : vector<512x128xf32>
    %31 = arith.addf %28, %30 : vector<512x128xf32>
    %c0_6 = arith.constant 0 : index
    %c0_7 = arith.constant 0 : index
    %32 = vector.load %arg2[%c0_6, %c0_7] : memref<512x128xf32, #tpu.memory_space<vmem>>, vector<512x128xf32>
    tpu.vector_store %arg2[%c0_6, %c0_7], %31 {strides = array<i32>} : memref<512x128xf32, #tpu.memory_space<vmem>>, vector<512x128xf32>,
    return
  }
  func.func @transform_0(%arg0: i32) -> (i32, i32) {
    %c0_i32 = arith.constant 0 : i32
    %c0_i32_0 = arith.constant 0 : i32
    return %arg0, %c0_i32 : i32, i32
  }
  func.func @transform_1(%arg0: i32) -> (i32, i32) {
    %c0_i32 = arith.constant 0 : i32
    %c0_i32_0 = arith.constant 0 : i32
    return %arg0, %c0_i32 : i32, i32
  }
}

</mosaic_0001>

<llo_original>
// kernel: tpu_custom_call.1
$region0: #{tpu_custom_call.1}
  #allocation0 [shape = 'u32[]', space=smem, size = 0x4, offset = 0x4, fixed_abs, tag = 'smem constant byte address 0x4 - core index']
  #allocation1 [shape = 'u32[144,128]{1,0:T(1,128)}', space=vmem, size = 0x12000, scoped, tag = 'internal scratch']
  %s0 = inlined_call_operand.hbm [shape: f32[512,128], index: 0, kind: input, shape index: {}]
  %s1 = inlined_call_operand.hbm [shape: f32[512,128], index: 1, kind: output, shape index: {}]
  %s2 = sld [smem:[#allocation0]]
  $region18: #{tpu_custom_call.1} parent=0
    _
  %s4 = ssub.s32 1, %s2
  %s5 = scalar_select 0, %s4, %s2
  $region1: #{tpu_custom_call.1} parent=0
    #allocation2 [shape = 'u8[262144]{0}', space=vmem, size = 0x40000, scoped, tag = 'input window, operand 0, single buffered']
    #allocation3 [shape = 's32[1]{0}', space=sflag, size = 0x4, scoped, tag = 'scoped memory for tpu_custom_call.1']
    #allocation4 [shape = 's32[1]{0}', space=sflag, size = 0x4, scoped, tag = 'scoped memory for tpu_custom_call.1']
    #allocation5 [shape = 'u8[262144]{0}', space=vmem, size = 0x40000, scoped, tag = 'output window, operand 0, single buffered']
    %6 = vsyncpa [#allocation3], 0
    %7 = vsyncpa [#allocation4], 0
    // Predicated region
    $region2: #{tpu_custom_call.1} parent=1 // pred_check
      _
    $region3: #{tpu_custom_call.1} parent=1 // pred_check_branch
      %9 = sbr.rel (0) target = $region5
    $region4: #{tpu_custom_call.1} parent=1 // pred_region
      %s11 = ssub.s32 8192, 8192
      %12 = vsyncadd [#allocation3], %s11
      %s13 = sshll.u32 [#allocation2], 4
      %s14 = int_to_ptr.vmem [resolvable:$true] %s13
      %19 = dma.hbm_to_vmem [thread:$0]  %s0, 8192, %s14, [#allocation3], 128, 128, 8
    $region5: #{tpu_custom_call.1} parent=1 // pred_fallthru
      _
    // Predicated region
    $region6: #{tpu_custom_call.1} parent=1 // pred_check
      _
    $region7: #{tpu_custom_call.1} parent=1 // pred_check_branch
      %21 = sbr.rel (0) target = $region9
    $region8: #{tpu_custom_call.1} parent=1 // pred_region
      %22 = dma.done [#allocation3], 8192
    $region9: #{tpu_custom_call.1} parent=1 // pred_fallthru
      _
    %v23 = vld [vmem:[#allocation2] sm:$0xff]
    %v24 = vld [vmem:[#allocation2 + $0x8] sm:$0xff]
    %v25 = vld [vmem:[#allocation2 + $0x10] sm:$0xff]
    %v26 = vld [vmem:[#allocation2 + $0x18] sm:$0xff]
    %v27 = vld [vmem:[#allocation2 + $0x20] sm:$0xff]
    %v28 = vld [vmem:[#allocation2 + $0x28] sm:$0xff]
    %v29 = vld [vmem:[#allocation2 + $0x30] sm:$0xff]
    %v30 = vld [vmem:[#allocation2 + $0x38] sm:$0xff]
    %v31 = vld [vmem:[#allocation2 + $0x40] sm:$0xff]
    %v32 = vld [vmem:[#allocation2 + $0x48] sm:$0xff]
    %v33 = vld [vmem:[#allocation2 + $0x50] sm:$0xff]
    %v34 = vld [vmem:[#allocation2 + $0x58] sm:$0xff]
    %v35 = vld [vmem:[#allocation2 + $0x60] sm:$0xff]
    %v36 = vld [vmem:[#allocation2 + $0x68] sm:$0xff]
    %v37 = vld [vmem:[#allocation2 + $0x70] sm:$0xff]
    %v38 = vld [vmem:[#allocation2 + $0x78] sm:$0xff]
    %v39 = vld [vmem:[#allocation2 + $0x80] sm:$0xff]
    %v40 = vld [vmem:[#allocation2 + $0x88] sm:$0xff]
    %v41 = vld [vmem:[#allocation2 + $0x90] sm:$0xff]
    %v42 = vld [vmem:[#allocation2 + $0x98] sm:$0xff]
    %v43 = vld [vmem:[#allocation2 + $0xa0] sm:$0xff]
    %v44 = vld [vmem:[#allocation2 + $0xa8] sm:$0xff]
    %v45 = vld [vmem:[#allocation2 + $0xb0] sm:$0xff]
    %v46 = vld [vmem:[#allocation2 + $0xb8] sm:$0xff]
    %v47 = vld [vmem:[#allocation2 + $0xc0] sm:$0xff]
    %v48 = vld [vmem:[#allocation2 + $0xc8] sm:$0xff]
    %v49 = vld [vmem:[#allocation2 + $0xd0] sm:$0xff]
    %v50 = vld [vmem:[#allocation2 + $0xd8] sm:$0xff]
    %v51 = vld [vmem:[#allocation2 + $0xe0] sm:$0xff]
    %v52 = vld [vmem:[#allocation2 + $0xe8] sm:$0xff]
    %v53 = vld [vmem:[#allocation2 + $0xf0] sm:$0xff]
    %v54 = vld [vmem:[#allocation2 + $0xf8] sm:$0xff]
    %v55 = vld [vmem:[#allocation2 + $0x100] sm:$0xff]
    %v56 = vld [vmem:[#allocation2 + $0x108] sm:$0xff]
    %v57 = vld [vmem:[#allocation2 + $0x110] sm:$0xff]
    %v58 = vld [vmem:[#allocation2 + $0x118] sm:$0xff]
    %v59 = vld [vmem:[#allocation2 + $0x120] sm:$0xff]
    %v60 = vld [vmem:[#allocation2 + $0x128] sm:$0xff]
    %v61 = vld [vmem:[#allocation2 + $0x130] sm:$0xff]
    %v62 = vld [vmem:[#allocation2 + $0x138] sm:$0xff]
    %v63 = vld [vmem:[#allocation2 + $0x140] sm:$0xff]
    %v64 = vld [vmem:[#allocation2 + $0x148] sm:$0xff]
    %v65 = vld [vmem:[#allocation2 + $0x150] sm:$0xff]
    %v66 = vld [vmem:[#allocation2 + $0x158] sm:$0xff]
    %v67 = vld [vmem:[#allocation2 + $0x160] sm:$0xff]
    %v68 = vld [vmem:[#allocation2 + $0x168] sm:$0xff]
    %v69 = vld [vmem:[#allocation2 + $0x170] sm:$0xff]
    %v70 = vld [vmem:[#allocation2 + $0x178] sm:$0xff]
    %v71 = vld [vmem:[#allocation2 + $0x180] sm:$0xff]
    %v72 = vld [vmem:[#allocation2 + $0x188] sm:$0xff]
    %v73 = vld [vmem:[#allocation2 + $0x190] sm:$0xff]
    %v74 = vld [vmem:[#allocation2 + $0x198] sm:$0xff]
    %v75 = vld [vmem:[#allocation2 + $0x1a0] sm:$0xff]
    %v76 = vld [vmem:[#allocation2 + $0x1a8] sm:$0xff]
    %v77 = vld [vmem:[#allocation2 + $0x1b0] sm:$0xff]
    %v78 = vld [vmem:[#allocation2 + $0x1b8] sm:$0xff]
    %v79 = vld [vmem:[#allocation2 + $0x1c0] sm:$0xff]
    %v80 = vld [vmem:[#allocation2 + $0x1c8] sm:$0xff]
    %v81 = vld [vmem:[#allocation2 + $0x1d0] sm:$0xff]
    %v82 = vld [vmem:[#allocation2 + $0x1d8] sm:$0xff]
    %v83 = vld [vmem:[#allocation2 + $0x1e0] sm:$0xff]
    %v84 = vld [vmem:[#allocation2 + $0x1e8] sm:$0xff]
    %v85 = vld [vmem:[#allocation2 + $0x1f0] sm:$0xff]
    %v86 = vld [vmem:[#allocation2 + $0x1f8] sm:$0xff]
    %151 = vrot.lane.b32.xlu0 %v23, 127
    %v152 = vpop.permute.xlu0 %151
    %153 = vrot.lane.b32.xlu0 %v24, 127
    %v154 = vpop.permute.xlu0 %153
    %155 = vrot.lane.b32.xlu0 %v25, 127
    %v156 = vpop.permute.xlu0 %155
    %157 = vrot.lane.b32.xlu0 %v26, 127
    %v158 = vpop.permute.xlu0 %157
    %159 = vrot.lane.b32.xlu0 %v27, 127
    %v160 = vpop.permute.xlu0 %159
    %161 = vrot.lane.b32.xlu0 %v28, 127
    %v162 = vpop.permute.xlu0 %161
    %163 = vrot.lane.b32.xlu0 %v29, 127
    %v164 = vpop.permute.xlu0 %163
    %165 = vrot.lane.b32.xlu0 %v30, 127
    %v166 = vpop.permute.xlu0 %165
    %167 = vrot.lane.b32.xlu0 %v31, 127
    %v168 = vpop.permute.xlu0 %167
    %169 = vrot.lane.b32.xlu0 %v32, 127
    %v170 = vpop.permute.xlu0 %169
    %171 = vrot.lane.b32.xlu0 %v33, 127
    %v172 = vpop.permute.xlu0 %171
    %173 = vrot.lane.b32.xlu0 %v34, 127
    %v174 = vpop.permute.xlu0 %173
    %175 = vrot.lane.b32.xlu0 %v35, 127
    %v176 = vpop.permute.xlu0 %175
    %177 = vrot.lane.b32.xlu0 %v36, 127
    %v178 = vpop.permute.xlu0 %177
    %179 = vrot.lane.b32.xlu0 %v37, 127
    %v180 = vpop.permute.xlu0 %179
    %181 = vrot.lane.b32.xlu0 %v38, 127
    %v182 = vpop.permute.xlu0 %181
    %183 = vrot.lane.b32.xlu0 %v39, 127
    %v184 = vpop.permute.xlu0 %183
    %185 = vrot.lane.b32.xlu0 %v40, 127
    %v186 = vpop.permute.xlu0 %185
    %187 = vrot.lane.b32.xlu0 %v41, 127
    %v188 = vpop.permute.xlu0 %187
    %189 = vrot.lane.b32.xlu0 %v42, 127
    %v190 = vpop.permute.xlu0 %189
    %191 = vrot.lane.b32.xlu0 %v43, 127
    %v192 = vpop.permute.xlu0 %191
    %193 = vrot.lane.b32.xlu0 %v44, 127
    %v194 = vpop.permute.xlu0 %193
    %195 = vrot.lane.b32.xlu0 %v45, 127
    %v196 = vpop.permute.xlu0 %195
    %197 = vrot.lane.b32.xlu0 %v46, 127
    %v198 = vpop.permute.xlu0 %197
    %199 = vrot.lane.b32.xlu0 %v47, 127
    %v200 = vpop.permute.xlu0 %199
    %201 = vrot.lane.b32.xlu0 %v48, 127
    %v202 = vpop.permute.xlu0 %201
    %203 = vrot.lane.b32.xlu0 %v49, 127
    %v204 = vpop.permute.xlu0 %203
    %205 = vrot.lane.b32.xlu0 %v50, 127
    %v206 = vpop.permute.xlu0 %205
    %207 = vrot.lane.b32.xlu0 %v51, 127
    %v208 = vpop.permute.xlu0 %207
    %209 = vrot.lane.b32.xlu0 %v52, 127
    %v210 = vpop.permute.xlu0 %209
    %211 = vrot.lane.b32.xlu0 %v53, 127
    %v212 = vpop.permute.xlu0 %211
    %213 = vrot.lane.b32.xlu0 %v54, 127
    %v214 = vpop.permute.xlu0 %213
    %215 = vrot.lane.b32.xlu0 %v55, 127
    %v216 = vpop.permute.xlu0 %215
    %217 = vrot.lane.b32.xlu0 %v56, 127
    %v218 = vpop.permute.xlu0 %217
    %219 = vrot.lane.b32.xlu0 %v57, 127
    %v220 = vpop.permute.xlu0 %219
    %221 = vrot.lane.b32.xlu0 %v58, 127
    %v222 = vpop.permute.xlu0 %221
    %223 = vrot.lane.b32.xlu0 %v59, 127
    %v224 = vpop.permute.xlu0 %223
    %225 = vrot.lane.b32.xlu0 %v60, 127
    %v226 = vpop.permute.xlu0 %225
    %227 = vrot.lane.b32.xlu0 %v61, 127
    %v228 = vpop.permute.xlu0 %227
    %229 = vrot.lane.b32.xlu0 %v62, 127
    %v230 = vpop.permute.xlu0 %229
    %231 = vrot.lane.b32.xlu0 %v63, 127
    %v232 = vpop.permute.xlu0 %231
    %233 = vrot.lane.b32.xlu0 %v64, 127
    %v234 = vpop.permute.xlu0 %233
    %235 = vrot.lane.b32.xlu0 %v65, 127
    %v236 = vpop.permute.xlu0 %235
    %237 = vrot.lane.b32.xlu0 %v66, 127
    %v238 = vpop.permute.xlu0 %237
    %239 = vrot.lane.b32.xlu0 %v67, 127
    %v240 = vpop.permute.xlu0 %239
    %241 = vrot.lane.b32.xlu0 %v68, 127
    %v242 = vpop.permute.xlu0 %241
    %243 = vrot.lane.b32.xlu0 %v69, 127
    %v244 = vpop.permute.xlu0 %243
    %245 = vrot.lane.b32.xlu0 %v70, 127
    %v246 = vpop.permute.xlu0 %245
    %247 = vrot.lane.b32.xlu0 %v71, 127
    %v248 = vpop.permute.xlu0 %247
    %249 = vrot.lane.b32.xlu0 %v72, 127
    %v250 = vpop.permute.xlu0 %249
    %251 = vrot.lane.b32.xlu0 %v73, 127
    %v252 = vpop.permute.xlu0 %251
    %253 = vrot.lane.b32.xlu0 %v74, 127
    %v254 = vpop.permute.xlu0 %253
    %255 = vrot.lane.b32.xlu0 %v75, 127
    %v256 = vpop.permute.xlu0 %255
    %257 = vrot.lane.b32.xlu0 %v76, 127
    %v258 = vpop.permute.xlu0 %257
    %259 = vrot.lane.b32.xlu0 %v77, 127
    %v260 = vpop.permute.xlu0 %259
    %261 = vrot.lane.b32.xlu0 %v78, 127
    %v262 = vpop.permute.xlu0 %261
    %263 = vrot.lane.b32.xlu0 %v79, 127
    %v264 = vpop.permute.xlu0 %263
    %265 = vrot.lane.b32.xlu0 %v80, 127
    %v266 = vpop.permute.xlu0 %265
    %267 = vrot.lane.b32.xlu0 %v81, 127
    %v268 = vpop.permute.xlu0 %267
    %269 = vrot.lane.b32.xlu0 %v82, 127
    %v270 = vpop.permute.xlu0 %269
    %271 = vrot.lane.b32.xlu0 %v83, 127
    %v272 = vpop.permute.xlu0 %271
    %273 = vrot.lane.b32.xlu0 %v84, 127
    %v274 = vpop.permute.xlu0 %273
    %275 = vrot.lane.b32.xlu0 %v85, 127
    %v276 = vpop.permute.xlu0 %275
    %277 = vrot.lane.b32.xlu0 %v86, 127
    %v278 = vpop.permute.xlu0 %277
    %343 = vrot.lane.b32.xlu0 %v23, 1
    %v344 = vpop.permute.xlu0 %343
    %345 = vrot.lane.b32.xlu0 %v24, 1
    %v346 = vpop.permute.xlu0 %345
    %347 = vrot.lane.b32.xlu0 %v25, 1
    %v348 = vpop.permute.xlu0 %347
    %349 = vrot.lane.b32.xlu0 %v26, 1
    %v350 = vpop.permute.xlu0 %349
    %351 = vrot.lane.b32.xlu0 %v27, 1
    %v352 = vpop.permute.xlu0 %351
    %353 = vrot.lane.b32.xlu0 %v28, 1
    %v354 = vpop.permute.xlu0 %353
    %355 = vrot.lane.b32.xlu0 %v29, 1
    %v356 = vpop.permute.xlu0 %355
    %357 = vrot.lane.b32.xlu0 %v30, 1
    %v358 = vpop.permute.xlu0 %357
    %359 = vrot.lane.b32.xlu0 %v31, 1
    %v360 = vpop.permute.xlu0 %359
    %361 = vrot.lane.b32.xlu0 %v32, 1
    %v362 = vpop.permute.xlu0 %361
    %363 = vrot.lane.b32.xlu0 %v33, 1
    %v364 = vpop.permute.xlu0 %363
    %365 = vrot.lane.b32.xlu0 %v34, 1
    %v366 = vpop.permute.xlu0 %365
    %367 = vrot.lane.b32.xlu0 %v35, 1
    %v368 = vpop.permute.xlu0 %367
    %369 = vrot.lane.b32.xlu0 %v36, 1
    %v370 = vpop.permute.xlu0 %369
    %371 = vrot.lane.b32.xlu0 %v37, 1
    %v372 = vpop.permute.xlu0 %371
    %373 = vrot.lane.b32.xlu0 %v38, 1
    %v374 = vpop.permute.xlu0 %373
    %375 = vrot.lane.b32.xlu0 %v39, 1
    %v376 = vpop.permute.xlu0 %375
    %377 = vrot.lane.b32.xlu0 %v40, 1
    %v378 = vpop.permute.xlu0 %377
    %379 = vrot.lane.b32.xlu0 %v41, 1
    %v380 = vpop.permute.xlu0 %379
    %381 = vrot.lane.b32.xlu0 %v42, 1
    %v382 = vpop.permute.xlu0 %381
    %383 = vrot.lane.b32.xlu0 %v43, 1
    %v384 = vpop.permute.xlu0 %383
    %385 = vrot.lane.b32.xlu0 %v44, 1
    %v386 = vpop.permute.xlu0 %385
    %387 = vrot.lane.b32.xlu0 %v45, 1
    %v388 = vpop.permute.xlu0 %387
    %389 = vrot.lane.b32.xlu0 %v46, 1
    %v390 = vpop.permute.xlu0 %389
    %391 = vrot.lane.b32.xlu0 %v47, 1
    %v392 = vpop.permute.xlu0 %391
    %393 = vrot.lane.b32.xlu0 %v48, 1
    %v394 = vpop.permute.xlu0 %393
    %395 = vrot.lane.b32.xlu0 %v49, 1
    %v396 = vpop.permute.xlu0 %395
    %397 = vrot.lane.b32.xlu0 %v50, 1
    %v398 = vpop.permute.xlu0 %397
    %399 = vrot.lane.b32.xlu0 %v51, 1
    %v400 = vpop.permute.xlu0 %399
    %401 = vrot.lane.b32.xlu0 %v52, 1
    %v402 = vpop.permute.xlu0 %401
    %403 = vrot.lane.b32.xlu0 %v53, 1
    %v404 = vpop.permute.xlu0 %403
    %405 = vrot.lane.b32.xlu0 %v54, 1
    %v406 = vpop.permute.xlu0 %405
    %407 = vrot.lane.b32.xlu0 %v55, 1
    %v408 = vpop.permute.xlu0 %407
    %409 = vrot.lane.b32.xlu0 %v56, 1
    %v410 = vpop.permute.xlu0 %409
    %411 = vrot.lane.b32.xlu0 %v57, 1
    %v412 = vpop.permute.xlu0 %411
    %413 = vrot.lane.b32.xlu0 %v58, 1
    %v414 = vpop.permute.xlu0 %413
    %415 = vrot.lane.b32.xlu0 %v59, 1
    %v416 = vpop.permute.xlu0 %415
    %417 = vrot.lane.b32.xlu0 %v60, 1
    %v418 = vpop.permute.xlu0 %417
    %419 = vrot.lane.b32.xlu0 %v61, 1
    %v420 = vpop.permute.xlu0 %419
    %421 = vrot.lane.b32.xlu0 %v62, 1
    %v422 = vpop.permute.xlu0 %421
    %423 = vrot.lane.b32.xlu0 %v63, 1
    %v424 = vpop.permute.xlu0 %423
    %425 = vrot.lane.b32.xlu0 %v64, 1
    %v426 = vpop.permute.xlu0 %425
    %427 = vrot.lane.b32.xlu0 %v65, 1
    %v428 = vpop.permute.xlu0 %427
    %429 = vrot.lane.b32.xlu0 %v66, 1
    %v430 = vpop.permute.xlu0 %429
    %431 = vrot.lane.b32.xlu0 %v67, 1
    %v432 = vpop.permute.xlu0 %431
    %433 = vrot.lane.b32.xlu0 %v68, 1
    %v434 = vpop.permute.xlu0 %433
    %435 = vrot.lane.b32.xlu0 %v69, 1
    %v436 = vpop.permute.xlu0 %435
    %437 = vrot.lane.b32.xlu0 %v70, 1
    %v438 = vpop.permute.xlu0 %437
    %439 = vrot.lane.b32.xlu0 %v71, 1
    %v440 = vpop.permute.xlu0 %439
    %441 = vrot.lane.b32.xlu0 %v72, 1
    %v442 = vpop.permute.xlu0 %441
    %443 = vrot.lane.b32.xlu0 %v73, 1
    %v444 = vpop.permute.xlu0 %443
    %445 = vrot.lane.b32.xlu0 %v74, 1
    %v446 = vpop.permute.xlu0 %445
    %447 = vrot.lane.b32.xlu0 %v75, 1
    %v448 = vpop.permute.xlu0 %447
    %449 = vrot.lane.b32.xlu0 %v76, 1
    %v450 = vpop.permute.xlu0 %449
    %451 = vrot.lane.b32.xlu0 %v77, 1
    %v452 = vpop.permute.xlu0 %451
    %453 = vrot.lane.b32.xlu0 %v78, 1
    %v454 = vpop.permute.xlu0 %453
    %455 = vrot.lane.b32.xlu0 %v79, 1
    %v456 = vpop.permute.xlu0 %455
    %457 = vrot.lane.b32.xlu0 %v80, 1
    %v458 = vpop.permute.xlu0 %457
    %459 = vrot.lane.b32.xlu0 %v81, 1
    %v460 = vpop.permute.xlu0 %459
    %461 = vrot.lane.b32.xlu0 %v82, 1
    %v462 = vpop.permute.xlu0 %461
    %463 = vrot.lane.b32.xlu0 %v83, 1
    %v464 = vpop.permute.xlu0 %463
    %465 = vrot.lane.b32.xlu0 %v84, 1
    %v466 = vpop.permute.xlu0 %465
    %467 = vrot.lane.b32.xlu0 %v85, 1
    %v468 = vpop.permute.xlu0 %467
    %469 = vrot.lane.b32.xlu0 %v86, 1
    %v470 = vpop.permute.xlu0 %469
    %v535 = vlaneseq
    %v536 = vand.u32 %v535, 127
    %vm537 = vcmp.lt.s32.totalorder %v536, 0
    %v538 = vsub.s32 0, %v536
    %v539 = vsel %vm537, %v538, %v536
    %v540 = vshrl.u32 %v539, 1
    %v541 = vand.u32 %v539, 1
    %v542 = vsub.s32 0, %v541
    %v543 = vsel %vm537, %v542, %v541
    %vm544 = vcmp.ne.s32.totalorder %v543, 0
    %vm545 = vcmp.lt.s32.totalorder %v543, 0
    %vm546 = vmand %vm545, %vm544
    %v547 = vadd.s32 %v543, 2
    %v548 = vsel %vm546, %v547, %v543
    %vm549 = vcmp.eq.s32.totalorder %v548, 0
    %v550 = vsel %vm549, %v152, %v344
    %v551 = vsel %vm549, %v154, %v346
    %v552 = vsel %vm549, %v156, %v348
    %v553 = vsel %vm549, %v158, %v350
    %v554 = vsel %vm549, %v160, %v352
    %v555 = vsel %vm549, %v162, %v354
    %v556 = vsel %vm549, %v164, %v356
    %v557 = vsel %vm549, %v166, %v358
    %v558 = vsel %vm549, %v168, %v360
    %v559 = vsel %vm549, %v170, %v362
    %v560 = vsel %vm549, %v172, %v364
    %v561 = vsel %vm549, %v174, %v366
    %v562 = vsel %vm549, %v176, %v368
    %v563 = vsel %vm549, %v178, %v370
    %v564 = vsel %vm549, %v180, %v372
    %v565 = vsel %vm549, %v182, %v374
    %v566 = vsel %vm549, %v184, %v376
    %v567 = vsel %vm549, %v186, %v378
    %v568 = vsel %vm549, %v188, %v380
    %v569 = vsel %vm549, %v190, %v382
    %v570 = vsel %vm549, %v192, %v384
    %v571 = vsel %vm549, %v194, %v386
    %v572 = vsel %vm549, %v196, %v388
    %v573 = vsel %vm549, %v198, %v390
    %v574 = vsel %vm549, %v200, %v392
    %v575 = vsel %vm549, %v202, %v394
    %v576 = vsel %vm549, %v204, %v396
    %v577 = vsel %vm549, %v206, %v398
    %v578 = vsel %vm549, %v208, %v400
    %v579 = vsel %vm549, %v210, %v402
    %v580 = vsel %vm549, %v212, %v404
    %v581 = vsel %vm549, %v214, %v406
    %v582 = vsel %vm549, %v216, %v408
    %v583 = vsel %vm549, %v218, %v410
    %v584 = vsel %vm549, %v220, %v412
    %v585 = vsel %vm549, %v222, %v414
    %v586 = vsel %vm549, %v224, %v416
    %v587 = vsel %vm549, %v226, %v418
    %v588 = vsel %vm549, %v228, %v420
    %v589 = vsel %vm549, %v230, %v422
    %v590 = vsel %vm549, %v232, %v424
    %v591 = vsel %vm549, %v234, %v426
    %v592 = vsel %vm549, %v236, %v428
    %v593 = vsel %vm549, %v238, %v430
    %v594 = vsel %vm549, %v240, %v432
    %v595 = vsel %vm549, %v242, %v434
    %v596 = vsel %vm549, %v244, %v436
    %v597 = vsel %vm549, %v246, %v438
    %v598 = vsel %vm549, %v248, %v440
    %v599 = vsel %vm549, %v250, %v442
    %v600 = vsel %vm549, %v252, %v444
    %v601 = vsel %vm549, %v254, %v446
    %v602 = vsel %vm549, %v256, %v448
    %v603 = vsel %vm549, %v258, %v450
    %v604 = vsel %vm549, %v260, %v452
    %v605 = vsel %vm549, %v262, %v454
    %v606 = vsel %vm549, %v264, %v456
    %v607 = vsel %vm549, %v266, %v458
    %v608 = vsel %vm549, %v268, %v460
    %v609 = vsel %vm549, %v270, %v462
    %v610 = vsel %vm549, %v272, %v464
    %v611 = vsel %vm549, %v274, %v466
    %v612 = vsel %vm549, %v276, %v468
    %v613 = vsel %vm549, %v278, %v470
    %v614 = vmul.f32 %v23, -6.0
    %v615 = vmul.f32 %v24, -6.0
    %v616 = vmul.f32 %v25, -6.0
    %v617 = vmul.f32 %v26, -6.0
    %v618 = vmul.f32 %v27, -6.0
    %v619 = vmul.f32 %v28, -6.0
    %v620 = vmul.f32 %v29, -6.0
    %v621 = vmul.f32 %v30, -6.0
    %v622 = vmul.f32 %v31, -6.0
    %v623 = vmul.f32 %v32, -6.0
    %v624 = vmul.f32 %v33, -6.0
    %v625 = vmul.f32 %v34, -6.0
    %v626 = vmul.f32 %v35, -6.0
    %v627 = vmul.f32 %v36, -6.0
    %v628 = vmul.f32 %v37, -6.0
    %v629 = vmul.f32 %v38, -6.0
    %v630 = vmul.f32 %v39, -6.0
    %v631 = vmul.f32 %v40, -6.0
    %v632 = vmul.f32 %v41, -6.0
    %v633 = vmul.f32 %v42, -6.0
    %v634 = vmul.f32 %v43, -6.0
    %v635 = vmul.f32 %v44, -6.0
    %v636 = vmul.f32 %v45, -6.0
    %v637 = vmul.f32 %v46, -6.0
    %v638 = vmul.f32 %v47, -6.0
    %v639 = vmul.f32 %v48, -6.0
    %v640 = vmul.f32 %v49, -6.0
    %v641 = vmul.f32 %v50, -6.0
    %v642 = vmul.f32 %v51, -6.0
    %v643 = vmul.f32 %v52, -6.0
    %v644 = vmul.f32 %v53, -6.0
    %v645 = vmul.f32 %v54, -6.0
    %v646 = vmul.f32 %v55, -6.0
    %v647 = vmul.f32 %v56, -6.0
    %v648 = vmul.f32 %v57, -6.0
    %v649 = vmul.f32 %v58, -6.0
    %v650 = vmul.f32 %v59, -6.0
    %v651 = vmul.f32 %v60, -6.0
    %v652 = vmul.f32 %v61, -6.0
    %v653 = vmul.f32 %v62, -6.0
    %v654 = vmul.f32 %v63, -6.0
    %v655 = vmul.f32 %v64, -6.0
    %v656 = vmul.f32 %v65, -6.0
    %v657 = vmul.f32 %v66, -6.0
    %v658 = vmul.f32 %v67, -6.0
    %v659 = vmul.f32 %v68, -6.0
    %v660 = vmul.f32 %v69, -6.0
    %v661 = vmul.f32 %v70, -6.0
    %v662 = vmul.f32 %v71, -6.0
    %v663 = vmul.f32 %v72, -6.0
    %v664 = vmul.f32 %v73, -6.0
    %v665 = vmul.f32 %v74, -6.0
    %v666 = vmul.f32 %v75, -6.0
    %v667 = vmul.f32 %v76, -6.0
    %v668 = vmul.f32 %v77, -6.0
    %v669 = vmul.f32 %v78, -6.0
    %v670 = vmul.f32 %v79, -6.0
    %v671 = vmul.f32 %v80, -6.0
    %v672 = vmul.f32 %v81, -6.0
    %v673 = vmul.f32 %v82, -6.0
    %v674 = vmul.f32 %v83, -6.0
    %v675 = vmul.f32 %v84, -6.0
    %v676 = vmul.f32 %v85, -6.0
    %v677 = vmul.f32 %v86, -6.0
    %v678 = vmul.f32 %v550, 4.0
    %v679 = vmul.f32 %v551, 4.0
    %v680 = vmul.f32 %v552, 4.0
    %v681 = vmul.f32 %v553, 4.0
    %v682 = vmul.f32 %v554, 4.0
    %v683 = vmul.f32 %v555, 4.0
    %v684 = vmul.f32 %v556, 4.0
    %v685 = vmul.f32 %v557, 4.0
    %v686 = vmul.f32 %v558, 4.0
    %v687 = vmul.f32 %v559, 4.0
    %v688 = vmul.f32 %v560, 4.0
    %v689 = vmul.f32 %v561, 4.0
    %v690 = vmul.f32 %v562, 4.0
    %v691 = vmul.f32 %v563, 4.0
    %v692 = vmul.f32 %v564, 4.0
    %v693 = vmul.f32 %v565, 4.0
    %v694 = vmul.f32 %v566, 4.0
    %v695 = vmul.f32 %v567, 4.0
    %v696 = vmul.f32 %v568, 4.0
    %v697 = vmul.f32 %v569, 4.0
    %v698 = vmul.f32 %v570, 4.0
    %v699 = vmul.f32 %v571, 4.0
    %v700 = vmul.f32 %v572, 4.0
    %v701 = vmul.f32 %v573, 4.0
    %v702 = vmul.f32 %v574, 4.0
    %v703 = vmul.f32 %v575, 4.0
    %v704 = vmul.f32 %v576, 4.0
    %v705 = vmul.f32 %v577, 4.0
    %v706 = vmul.f32 %v578, 4.0
    %v707 = vmul.f32 %v579, 4.0
    %v708 = vmul.f32 %v580, 4.0
    %v709 = vmul.f32 %v581, 4.0
    %v710 = vmul.f32 %v582, 4.0
    %v711 = vmul.f32 %v583, 4.0
    %v712 = vmul.f32 %v584, 4.0
    %v713 = vmul.f32 %v585, 4.0
    %v714 = vmul.f32 %v586, 4.0
    %v715 = vmul.f32 %v587, 4.0
    %v716 = vmul.f32 %v588, 4.0
    %v717 = vmul.f32 %v589, 4.0
    %v718 = vmul.f32 %v590, 4.0
    %v719 = vmul.f32 %v591, 4.0
    %v720 = vmul.f32 %v592, 4.0
    %v721 = vmul.f32 %v593, 4.0
    %v722 = vmul.f32 %v594, 4.0
    %v723 = vmul.f32 %v595, 4.0
    %v724 = vmul.f32 %v596, 4.0
    %v725 = vmul.f32 %v597, 4.0
    %v726 = vmul.f32 %v598, 4.0
    %v727 = vmul.f32 %v599, 4.0
    %v728 = vmul.f32 %v600, 4.0
    %v729 = vmul.f32 %v601, 4.0
    %v730 = vmul.f32 %v602, 4.0
    %v731 = vmul.f32 %v603, 4.0
    %v732 = vmul.f32 %v604, 4.0
    %v733 = vmul.f32 %v605, 4.0
    %v734 = vmul.f32 %v606, 4.0
    %v735 = vmul.f32 %v607, 4.0
    %v736 = vmul.f32 %v608, 4.0
    %v737 = vmul.f32 %v609, 4.0
    %v738 = vmul.f32 %v610, 4.0
    %v739 = vmul.f32 %v611, 4.0
    %v740 = vmul.f32 %v612, 4.0
    %v741 = vmul.f32 %v613, 4.0
    %v742 = vadd.f32 %v614, %v678
    %v743 = vadd.f32 %v615, %v679
    %v744 = vadd.f32 %v616, %v680
    %v745 = vadd.f32 %v617, %v681
    %v746 = vadd.f32 %v618, %v682
    %v747 = vadd.f32 %v619, %v683
    %v748 = vadd.f32 %v620, %v684
    %v749 = vadd.f32 %v621, %v685
    %v750 = vadd.f32 %v622, %v686
    %v751 = vadd.f32 %v623, %v687
    %v752 = vadd.f32 %v624, %v688
    %v753 = vadd.f32 %v625, %v689
    %v754 = vadd.f32 %v626, %v690
    %v755 = vadd.f32 %v627, %v691
    %v756 = vadd.f32 %v628, %v692
    %v757 = vadd.f32 %v629, %v693
    %v758 = vadd.f32 %v630, %v694
    %v759 = vadd.f32 %v631, %v695
    %v760 = vadd.f32 %v632, %v696
    %v761 = vadd.f32 %v633, %v697
    %v762 = vadd.f32 %v634, %v698
    %v763 = vadd.f32 %v635, %v699
    %v764 = vadd.f32 %v636, %v700
    %v765 = vadd.f32 %v637, %v701
    %v766 = vadd.f32 %v638, %v702
    %v767 = vadd.f32 %v639, %v703
    %v768 = vadd.f32 %v640, %v704
    %v769 = vadd.f32 %v641, %v705
    %v770 = vadd.f32 %v642, %v706
    %v771 = vadd.f32 %v643, %v707
    %v772 = vadd.f32 %v644, %v708
    %v773 = vadd.f32 %v645, %v709
    %v774 = vadd.f32 %v646, %v710
    %v775 = vadd.f32 %v647, %v711
    %v776 = vadd.f32 %v648, %v712
    %v777 = vadd.f32 %v649, %v713
    %v778 = vadd.f32 %v650, %v714
    %v779 = vadd.f32 %v651, %v715
    %v780 = vadd.f32 %v652, %v716
    %v781 = vadd.f32 %v653, %v717
    %v782 = vadd.f32 %v654, %v718
    %v783 = vadd.f32 %v655, %v719
    %v784 = vadd.f32 %v656, %v720
    %v785 = vadd.f32 %v657, %v721
    %v786 = vadd.f32 %v658, %v722
    %v787 = vadd.f32 %v659, %v723
    %v788 = vadd.f32 %v660, %v724
    %v789 = vadd.f32 %v661, %v725
    %v790 = vadd.f32 %v662, %v726
    %v791 = vadd.f32 %v663, %v727
    %v792 = vadd.f32 %v664, %v728
    %v793 = vadd.f32 %v665, %v729
    %v794 = vadd.f32 %v666, %v730
    %v795 = vadd.f32 %v667, %v731
    %v796 = vadd.f32 %v668, %v732
    %v797 = vadd.f32 %v669, %v733
    %v798 = vadd.f32 %v670, %v734
    %v799 = vadd.f32 %v671, %v735
    %v800 = vadd.f32 %v672, %v736
    %v801 = vadd.f32 %v673, %v737
    %v802 = vadd.f32 %v674, %v738
    %v803 = vadd.f32 %v675, %v739
    %v804 = vadd.f32 %v676, %v740
    %v805 = vadd.f32 %v677, %v741
    %806 = vst [vmem:[#allocation5] sm:$0xff] %v742
    %807 = vst [vmem:[#allocation5 + $0x8] sm:$0xff] %v743
    %808 = vst [vmem:[#allocation5 + $0x10] sm:$0xff] %v744
    %809 = vst [vmem:[#allocation5 + $0x18] sm:$0xff] %v745
    %810 = vst [vmem:[#allocation5 + $0x20] sm:$0xff] %v746
    %811 = vst [vmem:[#allocation5 + $0x28] sm:$0xff] %v747
    %812 = vst [vmem:[#allocation5 + $0x30] sm:$0xff] %v748
    %813 = vst [vmem:[#allocation5 + $0x38] sm:$0xff] %v749
    %814 = vst [vmem:[#allocation5 + $0x40] sm:$0xff] %v750
    %815 = vst [vmem:[#allocation5 + $0x48] sm:$0xff] %v751
    %816 = vst [vmem:[#allocation5 + $0x50] sm:$0xff] %v752
    %817 = vst [vmem:[#allocation5 + $0x58] sm:$0xff] %v753
    %818 = vst [vmem:[#allocation5 + $0x60] sm:$0xff] %v754
    %819 = vst [vmem:[#allocation5 + $0x68] sm:$0xff] %v755
    %820 = vst [vmem:[#allocation5 + $0x70] sm:$0xff] %v756
    %821 = vst [vmem:[#allocation5 + $0x78] sm:$0xff] %v757
    %822 = vst [vmem:[#allocation5 + $0x80] sm:$0xff] %v758
    %823 = vst [vmem:[#allocation5 + $0x88] sm:$0xff] %v759
    %824 = vst [vmem:[#allocation5 + $0x90] sm:$0xff] %v760
    %825 = vst [vmem:[#allocation5 + $0x98] sm:$0xff] %v761
    %826 = vst [vmem:[#allocation5 + $0xa0] sm:$0xff] %v762
    %827 = vst [vmem:[#allocation5 + $0xa8] sm:$0xff] %v763
    %828 = vst [vmem:[#allocation5 + $0xb0] sm:$0xff] %v764
    %829 = vst [vmem:[#allocation5 + $0xb8] sm:$0xff] %v765
    %830 = vst [vmem:[#allocation5 + $0xc0] sm:$0xff] %v766
    %831 = vst [vmem:[#allocation5 + $0xc8] sm:$0xff] %v767
    %832 = vst [vmem:[#allocation5 + $0xd0] sm:$0xff] %v768
    %833 = vst [vmem:[#allocation5 + $0xd8] sm:$0xff] %v769
    %834 = vst [vmem:[#allocation5 + $0xe0] sm:$0xff] %v770
    %835 = vst [vmem:[#allocation5 + $0xe8] sm:$0xff] %v771
    %836 = vst [vmem:[#allocation5 + $0xf0] sm:$0xff] %v772
    %837 = vst [vmem:[#allocation5 + $0xf8] sm:$0xff] %v773
    %838 = vst [vmem:[#allocation5 + $0x100] sm:$0xff] %v774
    %839 = vst [vmem:[#allocation5 + $0x108] sm:$0xff] %v775
    %840 = vst [vmem:[#allocation5 + $0x110] sm:$0xff] %v776
    %841 = vst [vmem:[#allocation5 + $0x118] sm:$0xff] %v777
    %842 = vst [vmem:[#allocation5 + $0x120] sm:$0xff] %v778
    %843 = vst [vmem:[#allocation5 + $0x128] sm:$0xff] %v779
    %844 = vst [vmem:[#allocation5 + $0x130] sm:$0xff] %v780
    %845 = vst [vmem:[#allocation5 + $0x138] sm:$0xff] %v781
    %846 = vst [vmem:[#allocation5 + $0x140] sm:$0xff] %v782
    %847 = vst [vmem:[#allocation5 + $0x148] sm:$0xff] %v783
    %848 = vst [vmem:[#allocation5 + $0x150] sm:$0xff] %v784
    %849 = vst [vmem:[#allocation5 + $0x158] sm:$0xff] %v785
    %850 = vst [vmem:[#allocation5 + $0x160] sm:$0xff] %v786
    %851 = vst [vmem:[#allocation5 + $0x168] sm:$0xff] %v787
    %852 = vst [vmem:[#allocation5 + $0x170] sm:$0xff] %v788
    %853 = vst [vmem:[#allocation5 + $0x178] sm:$0xff] %v789
    %854 = vst [vmem:[#allocation5 + $0x180] sm:$0xff] %v790
    %855 = vst [vmem:[#allocation5 + $0x188] sm:$0xff] %v791
    %856 = vst [vmem:[#allocation5 + $0x190] sm:$0xff] %v792
    %857 = vst [vmem:[#allocation5 + $0x198] sm:$0xff] %v793
    %858 = vst [vmem:[#allocation5 + $0x1a0] sm:$0xff] %v794
    %859 = vst [vmem:[#allocation5 + $0x1a8] sm:$0xff] %v795
    %860 = vst [vmem:[#allocation5 + $0x1b0] sm:$0xff] %v796
    %861 = vst [vmem:[#allocation5 + $0x1b8] sm:$0xff] %v797
    %862 = vst [vmem:[#allocation5 + $0x1c0] sm:$0xff] %v798
    %863 = vst [vmem:[#allocation5 + $0x1c8] sm:$0xff] %v799
    %864 = vst [vmem:[#allocation5 + $0x1d0] sm:$0xff] %v800
    %865 = vst [vmem:[#allocation5 + $0x1d8] sm:$0xff] %v801
    %866 = vst [vmem:[#allocation5 + $0x1e0] sm:$0xff] %v802
    %867 = vst [vmem:[#allocation5 + $0x1e8] sm:$0xff] %v803
    %868 = vst [vmem:[#allocation5 + $0x1f0] sm:$0xff] %v804
    %869 = vst [vmem:[#allocation5 + $0x1f8] sm:$0xff] %v805
    // Predicated region
    $region10: #{tpu_custom_call.1} parent=1 // pred_check
      _
    $region11: #{tpu_custom_call.1} parent=1 // pred_check_branch
      %871 = sbr.rel (0) target = $region13
    $region12: #{tpu_custom_call.1} parent=1 // pred_region
      %s873 = ssub.s32 8192, 8192
      %874 = vsyncadd [#allocation4], %s873
      %s875 = sshll.u32 [#allocation5], 4
      %s876 = int_to_ptr.vmem [resolvable:$true] %s875
      %881 = dma.vmem_to_hbm [thread:$0]  %s876, 8192, %s1, [#allocation4], 128, 128, 8
    $region13: #{tpu_custom_call.1} parent=1 // pred_fallthru
      _
    // Predicated region
    $region14: #{tpu_custom_call.1} parent=1 // pred_check
      _
    $region15: #{tpu_custom_call.1} parent=1 // pred_check_branch
      %883 = sbr.rel (0) target = $region17
    $region16: #{tpu_custom_call.1} parent=1 // pred_region
      %884 = dma.done [#allocation4], 8192
    $region17: #{tpu_custom_call.1} parent=1 // pred_fallthru
      _
    %885 = vsyncpa [#allocation3], 1
    %886 = vsyncpa [#allocation4], 1

</llo_original>
